<compile_context>
chip_gen: v5e
topology: v5e:2x2
jax: 0.10.0
libtpu: 0.0.40
codegen_flags: <defaults>
</compile_context>

<pallas_src>
import jax
import jax.numpy as jnp
from jax import lax
from jax.experimental import pallas as pl
from jax.experimental.pallas import tpu as pltpu


def _lora_linear_kernel(x_ref, w_ref, b_ref, wd_ref, wu_ref, o_ref,
                        acc_ref, down_ref):
    # x_ref   : (tm, tk)      input tile (compute dtype)
    # w_ref   : (tn, tk)      fc.weight tile (PyTorch [out, in] layout)
    # b_ref   : (1, tn)       fc.bias tile
    # wd_ref  : (rp, tk)      LoRA down weight (rank padded to sublane multiple)
    # wu_ref  : (tn, rp)      LoRA up weight tile (lora_scale pre-folded)
    # o_ref   : (tm, tn)      output tile
    # acc_ref : (tm, tn) f32  base-path accumulator (persists across k)
    # down_ref: (tm, rp) f32  LoRA down-projection cache (persists across j, k)
    j = pl.program_id(1)
    k = pl.program_id(2)
    nk = pl.num_programs(2)
    dn = (((1,), (1,)), ((), ()))  # contract last dims -> transpose-free MXU feed

    @pl.when(k == 0)
    def _init_acc():
        acc_ref[...] = jnp.zeros_like(acc_ref)

    @pl.when(jnp.logical_and(j == 0, k == 0))
    def _init_down():
        down_ref[...] = jnp.zeros_like(down_ref)

    x = x_ref[...]

    # Base linear path: accumulate x @ W_fc^T over the K grid axis (f32 acc).
    acc_ref[...] += lax.dot_general(x, w_ref[...], dimension_numbers=dn,
                                    preferred_element_type=jnp.float32)

    # LoRA down-projection: j-independent, so compute it only on the first N
    # tile, accumulate over K, and reuse the cached result for every other j.
    @pl.when(j == 0)
    def _down():
        down_ref[...] += lax.dot_general(x, wd_ref[...], dimension_numbers=dn,
                                         preferred_element_type=jnp.float32)

    # Finalize: bias + LoRA up-projection, cast, store.
    @pl.when(k == nk - 1)
    def _finalize():
        up = lax.dot_general(down_ref[...].astype(wu_ref.dtype), wu_ref[...],
                             dimension_numbers=dn,
                             preferred_element_type=jnp.float32)
        out = acc_ref[...] + b_ref[...].astype(jnp.float32) + up
        o_ref[...] = out.astype(o_ref.dtype)


def _round_up(x, m):
    return (x + m - 1) // m * m


def _pad2(a, rows, cols):
    pr, pc = rows - a.shape[0], cols - a.shape[1]
    if pr == 0 and pc == 0:
        return a
    return jnp.pad(a, ((0, pr), (0, pc)))


def prepare_lora_linear_params(w_fc, b_fc, w_down, w_up, lora_scale=1.0, *,
                               compute_dtype=jnp.bfloat16, tn=256, tk=512):
    """One-time weight preparation (pad / cast / fold lora_scale), hoisted out
    of the per-call path.

    w_fc:   [out_features, in_features]   (nn.Linear weight)
    b_fc:   [out_features]                (nn.Linear bias)
    w_down: [rank, in_features]           (LoRA down weight)
    w_up:   [out_features, rank]          (LoRA up weight)
    compute_dtype=None keeps exact f32 semantics; bf16 (default) keeps f32
    accumulation but rounds MXU inputs.
    """
    n, k = w_fc.shape
    r = w_down.shape[0]

    if compute_dtype is None:
        compute_dtype = w_fc.dtype
    itemsize = jnp.dtype(compute_dtype).itemsize
    sublane = {4: 8, 2: 16, 1: 32}.get(itemsize, 8)

    # Lane-dense padding of K and N; rank only to a sublane multiple (it is a
    # sublane dim for W_down and a full-extent lane dim for W_up / scratch).
    k_pad = _round_up(k, 128)
    n_pad = _round_up(n, 128)
    r_pad = _round_up(r, sublane)

    # Keep tiles at multiples of 256 when possible (v6e/v7x MXU is 256-wide).
    lane_n = 256 if n_pad >= 256 else 128
    tn_eff = _round_up(min(tn, n_pad), lane_n)
    n_pad = _round_up(n_pad, tn_eff)

    lane_k = 256 if k_pad >= 256 else 128
    tk_eff = _round_up(min(tk, k_pad), lane_k)
    k_pad = _round_up(k_pad, tk_eff)

    # Fold lora_scale into W_up (removes a per-tile VPU multiply).
    w_up_scaled = w_up.astype(jnp.float32) * jnp.float32(lora_scale)

    return dict(
        w=_pad2(w_fc.astype(compute_dtype), n_pad, k_pad),
        b=_pad2(b_fc.reshape(1, n), 1, n_pad),
        wd=_pad2(w_down.astype(compute_dtype), r_pad, k_pad),
        wu=_pad2(w_up_scaled.astype(compute_dtype), n_pad, r_pad),
        n=n, k=k, k_pad=k_pad, n_pad=n_pad, r_pad=r_pad,
        tn=tn_eff, tk=tk_eff, sublane=sublane,
        compute_dtype=compute_dtype)


def lora_linear_apply(params, x, *, tm=256):
    """x: [..., in_features] -> [..., out_features] using prepared params."""
    orig_shape = x.shape
    out_dtype = x.dtype
    k, n = params["k"], params["n"]
    k_pad, n_pad, r_pad = params["k_pad"], params["n_pad"], params["r_pad"]
    tn, tk, sublane = params["tn"], params["tk"], params["sublane"]
    cdt = params["compute_dtype"]

    x2d = x.reshape(-1, k).astype(cdt)
    m = x2d.shape[0]

    # M tile: as large as requested, clamped to the (sublane-aligned) problem.
    tm_eff = _round_up(min(tm, _round_up(m, sublane)), sublane)
    m_pad = _round_up(m, tm_eff)
    x_p = _pad2(x2d, m_pad, k_pad)

    grid = (m_pad // tm_eff, n_pad // tn, k_pad // tk)

    # VMEM budget: double-buffered input/output tiles + scratch, with headroom,
    # capped below v7x's 64 MiB physical VMEM.
    csz = jnp.dtype(cdt).itemsize
    osz = jnp.dtype(out_dtype).itemsize
    bsz = jnp.dtype(params["b"].dtype).itemsize
    vmem_needed = 2 * (tm_eff * tk * csz + tn * tk * csz + 8 * tn * bsz
                       + r_pad * tk * csz + tn * r_pad * csz
                       + tm_eff * tn * osz)
    vmem_needed += tm_eff * tn * 4 + tm_eff * r_pad * 4  # f32 scratch
    vmem_limit = int(max(16 << 20, min(2 * vmem_needed + (4 << 20), 56 << 20)))

    out_pad = pl.pallas_call(
        _lora_linear_kernel,
        out_shape=jax.ShapeDtypeStruct((m_pad, n_pad), out_dtype),
        grid_spec=pltpu.PrefetchScalarGridSpec(
            num_scalar_prefetch=0,
            grid=grid,
            in_specs=[
                pl.BlockSpec((tm_eff, tk), lambda i, j, kk: (i, kk)),   # x
                pl.BlockSpec((tn, tk), lambda i, j, kk: (j, kk)),       # W_fc
                pl.BlockSpec((1, tn), lambda i, j, kk: (0, j)),         # bias
                pl.BlockSpec((r_pad, tk), lambda i, j, kk: (0, kk)),    # W_down
                pl.BlockSpec((tn, r_pad), lambda i, j, kk: (j, 0)),     # W_up
            ],
            out_specs=pl.BlockSpec((tm_eff, tn), lambda i, j, kk: (i, j)),
            scratch_shapes=[
                pltpu.VMEM((tm_eff, tn), jnp.float32),     # base accumulator
                pltpu.VMEM((tm_eff, r_pad), jnp.float32),  # LoRA down cache
            ],
        ),
        compiler_params=pltpu.CompilerParams(
            dimension_semantics=("parallel", "arbitrary", "arbitrary"),
            vmem_limit_bytes=vmem_limit),
    )(x_p, params["w"], params["b"], params["wd"], params["wu"])

    out2d = out_pad[:m, :n]
    return out2d.reshape(*orig_shape[:-1], n)


def monkey_patch_lora_linear(x, w_fc, b_fc, w_down, w_up, lora_scale=1.0, *,
                             tm=256, tn=256, tk=512,
                             compute_dtype=jnp.bfloat16):
    """One-shot convenience wrapper (prepare + apply)."""
    params = prepare_lora_linear_params(w_fc, b_fc, w_down, w_up, lora_scale,
                                        compute_dtype=compute_dtype,
                                        tn=tn, tk=tk)
    return lora_linear_apply(params, x, tm=tm)


if __name__ == "__main__":
    # Small shapes consistent with the module's forward.
    batch, seq, in_features, out_features, rank = 2, 8, 32, 32, 4

    key = jax.random.PRNGKey(0)
    kx, kw, kb, kd, ku = jax.random.split(key, 5)

    x = jax.random.normal(kx, (batch, seq, in_features), dtype=jnp.float32)

    # fc = nn.Linear(in_features, out_features): weight [out, in], bias [out].
    w_fc = jax.random.normal(kw, (out_features, in_features), dtype=jnp.float32) * 0.1
    b_fc = jax.random.normal(kb, (out_features,), dtype=jnp.float32) * 0.1

    # LoRALinearLayer init: down ~ N(0, 1/rank), up = zeros.
    w_down = jax.random.normal(kd, (rank, in_features), dtype=jnp.float32) * (1.0 / rank)
    w_up_init = jnp.zeros((out_features, rank), dtype=jnp.float32)
    w_up = jax.random.normal(ku, (out_features, rank), dtype=jnp.float32) * 0.1
    lora_scale = 0.5

    def ref_fn(x, w_fc, b_fc, w_down, w_up, s):
        return (x @ w_fc.T + b_fc) + s * ((x @ w_down.T) @ w_up.T)

    # --- Exact f32 mode (compute_dtype=None): matches PyTorch reference. ---
    p_exact = prepare_lora_linear_params(w_fc, b_fc, w_down, w_up_init, 1.0,
                                         compute_dtype=None)
    out1 = jax.block_until_ready(lora_linear_apply(p_exact, x))
    ref1 = ref_fn(x, w_fc, b_fc, w_down, w_up_init, 1.0)
    assert out1.shape == (batch, seq, out_features)
    assert jnp.allclose(out1, ref1, atol=1e-4, rtol=1e-4)

    p_exact2 = prepare_lora_linear_params(w_fc, b_fc, w_down, w_up, lora_scale,
                                          compute_dtype=None)
    out2 = jax.block_until_ready(lora_linear_apply(p_exact2, x))
    ref2 = ref_fn(x, w_fc, b_fc, w_down, w_up, lora_scale)
    assert jnp.allclose(out2, ref2, atol=1e-4, rtol=1e-4)

    # --- Default bf16 MXU-input mode (f32 accumulation): looser tolerance. ---
    out3 = jax.block_until_ready(
        monkey_patch_lora_linear(x, w_fc, b_fc, w_down, w_up, lora_scale))
    assert out3.shape == (batch, seq, out_features)
    assert jnp.allclose(out3, ref2, atol=3e-2, rtol=3e-2)

    print("KERNEL_OK")
</pallas_src>

<mosaic_0001>
module attributes {stable_mosaic.version = 11 : i64} {
  func.func @_lora_linear_kernel(%arg0: i32, %arg1: i32, %arg2: i32, %arg3: memref<16x128xf32, #tpu.memory_space<vmem>>, %arg4: memref<128x128xf32, #tpu.memory_space<vmem>>, %arg5: memref<1x128xf32, #tpu.memory_space<vmem>>, %arg6: memref<8x128xf32, #tpu.memory_space<vmem>>, %arg7: memref<128x8xf32, #tpu.memory_space<vmem>>, %arg8: memref<16x128xf32, #tpu.memory_space<vmem>>, %arg9: memref<16x128xf32, #tpu.memory_space<vmem>>, %arg10: memref<16x8xf32, #tpu.memory_space<vmem>>) attributes {dimension_semantics = [#tpu.dimension_semantics<parallel>, #tpu.dimension_semantics<arbitrary>, #tpu.dimension_semantics<arbitrary>], iteration_bounds = array<i64: 1, 1, 1>, scalar_prefetch = 0 : i64, scratch_operands = 2 : i64, tpu.core_type = #tpu.core_type<tc>, window_params = [{transform_indices = @transform_0, window_bounds = array<i64: 16, 128>}, {transform_indices = @transform_1, window_bounds = array<i64: 128, 128>}, {transform_indices = @transform_2, window_bounds = array<i64: 1, 128>}, {transform_indices = @transform_3, window_bounds = array<i64: 8, 128>}, {transform_indices = @transform_4, window_bounds = array<i64: 128, 8>}, {transform_indices = @transform_5, window_bounds = array<i64: 16, 128>}]} {
    %c0_i32 = arith.constant 0 : i32
    %0 = arith.cmpi eq, %arg2, %c0_i32 : i32
    %1 = arith.extui %0 : i1 to i32
    %c0_i32_0 = arith.constant 0 : i32
    %2 = arith.cmpi ne, %1, %c0_i32_0 : i32
    scf.if %2 {
      %cst_15 = arith.constant 0.000000e+00 : f32
      %20 = vector.broadcast %cst_15 : f32 to vector<16x128xf32>
      %c0_16 = arith.constant 0 : index
      %c0_17 = arith.constant 0 : index
      %21 = vector.load %arg9[%c0_16, %c0_17] : memref<16x128xf32, #tpu.memory_space<vmem>>, vector<16x128xf32>
      tpu.vector_store %arg9[%c0_16, %c0_17], %20 {strides = array<i32>} : memref<16x128xf32, #tpu.memory_space<vmem>>, vector<16x128xf32>,
    } else {
    }
    %c0_i32_1 = arith.constant 0 : i32
    %3 = arith.cmpi eq, %arg1, %c0_i32_1 : i32
    %c0_i32_2 = arith.constant 0 : i32
    %4 = arith.cmpi eq, %arg2, %c0_i32_2 : i32
    %5 = arith.andi %3, %4 : i1
    %6 = arith.extui %5 : i1 to i32
    %c0_i32_3 = arith.constant 0 : i32
    %7 = arith.cmpi ne, %6, %c0_i32_3 : i32
    scf.if %7 {
      %cst_15 = arith.constant 0.000000e+00 : f32
      %20 = vector.broadcast %cst_15 : f32 to vector<16x8xf32>
      %c0_16 = arith.constant 0 : index
      %c0_17 = arith.constant 0 : index
      %21 = vector.load %arg10[%c0_16, %c0_17] : memref<16x8xf32, #tpu.memory_space<vmem>>, vector<16x8xf32>
      tpu.vector_store %arg10[%c0_16, %c0_17], %20 {strides = array<i32>} : memref<16x8xf32, #tpu.memory_space<vmem>>, vector<16x8xf32>,
    } else {
    }
    %c0 = arith.constant 0 : index
    %c0_4 = arith.constant 0 : index
    %8 = vector.load %arg3[%c0, %c0_4] : memref<16x128xf32, #tpu.memory_space<vmem>>, vector<16x128xf32>
    %c0_5 = arith.constant 0 : index
    %c0_6 = arith.constant 0 : index
    %9 = vector.load %arg9[%c0_5, %c0_6] : memref<16x128xf32, #tpu.memory_space<vmem>>, vector<16x128xf32>
    %c0_7 = arith.constant 0 : index
    %c0_8 = arith.constant 0 : index
    %10 = vector.load %arg4[%c0_7, %c0_8] : memref<128x128xf32, #tpu.memory_space<vmem>>, vector<128x128xf32>
    %cst = arith.constant dense<0.000000e+00> : vector<16x128xf32>
    %11 = tpu.matmul %8, %10, %cst {dimension_numbers = #tpu.dot_dimension_numbers<[1], [1], [0], [0], [0, 0, 1, 0], [], []>} : vector<16x128xf32>, vector<128x128xf32>, vector<16x128xf32> -> vector<16x128xf32>
    %12 = arith.addf %9, %11 : vector<16x128xf32>
    %c0_9 = arith.constant 0 : index
    %c0_10 = arith.constant 0 : index
    %13 = vector.load %arg9[%c0_9, %c0_10] : memref<16x128xf32, #tpu.memory_space<vmem>>, vector<16x128xf32>
    tpu.vector_store %arg9[%c0_9, %c0_10], %12 {strides = array<i32>} : memref<16x128xf32, #tpu.memory_space<vmem>>, vector<16x128xf32>,
    %c0_i32_11 = arith.constant 0 : i32
    %14 = arith.cmpi eq, %arg1, %c0_i32_11 : i32
    %15 = arith.extui %14 : i1 to i32
    %c0_i32_12 = arith.constant 0 : i32
    %16 = arith.cmpi ne, %15, %c0_i32_12 : i32
    scf.if %16 {
      %c0_15 = arith.constant 0 : index
      %c0_16 = arith.constant 0 : index
      %20 = vector.load %arg10[%c0_15, %c0_16] : memref<16x8xf32, #tpu.memory_space<vmem>>, vector<16x8xf32>
      %c0_17 = arith.constant 0 : index
      %c0_18 = arith.constant 0 : index
      %21 = vector.load %arg6[%c0_17, %c0_18] : memref<8x128xf32, #tpu.memory_space<vmem>>, vector<8x128xf32>
      %cst_19 = arith.constant dense<0.000000e+00> : vector<16x8xf32>
      %22 = tpu.matmul %8, %21, %cst_19 {dimension_numbers = #tpu.dot_dimension_numbers<[1], [1], [0], [0], [0, 0, 1, 0], [], []>} : vector<16x128xf32>, vector<8x128xf32>, vector<16x8xf32> -> vector<16x8xf32>
      %23 = arith.addf %20, %22 : vector<16x8xf32>
      %c0_20 = arith.constant 0 : index
      %c0_21 = arith.constant 0 : index
      %24 = vector.load %arg10[%c0_20, %c0_21] : memref<16x8xf32, #tpu.memory_space<vmem>>, vector<16x8xf32>
      tpu.vector_store %arg10[%c0_20, %c0_21], %23 {strides = array<i32>} : memref<16x8xf32, #tpu.memory_space<vmem>>, vector<16x8xf32>,
    } else {
    }
    %c0_i32_13 = arith.constant 0 : i32
    %17 = arith.cmpi eq, %arg2, %c0_i32_13 : i32
    %18 = arith.extui %17 : i1 to i32
    %c0_i32_14 = arith.constant 0 : i32
    %19 = arith.cmpi ne, %18, %c0_i32_14 : i32
    scf.if %19 {
      %c0_15 = arith.constant 0 : index
      %c0_16 = arith.constant 0 : index
      %20 = vector.load %arg10[%c0_15, %c0_16] : memref<16x8xf32, #tpu.memory_space<vmem>>, vector<16x8xf32>
      %c0_17 = arith.constant 0 : index
      %c0_18 = arith.constant 0 : index
      %21 = vector.load %arg7[%c0_17, %c0_18] : memref<128x8xf32, #tpu.memory_space<vmem>>, vector<128x8xf32>
      %cst_19 = arith.constant dense<0.000000e+00> : vector<16x128xf32>
      %22 = tpu.matmul %20, %21, %cst_19 {dimension_numbers = #tpu.dot_dimension_numbers<[1], [1], [0], [0], [0, 0, 1, 0], [], []>} : vector<16x8xf32>, vector<128x8xf32>, vector<16x128xf32> -> vector<16x128xf32>
      %c0_20 = arith.constant 0 : index
      %c0_21 = arith.constant 0 : index
      %23 = vector.load %arg9[%c0_20, %c0_21] : memref<16x128xf32, #tpu.memory_space<vmem>>, vector<16x128xf32>
      %c0_22 = arith.constant 0 : index
      %c0_23 = arith.constant 0 : index
      %24 = vector.load %arg5[%c0_22, %c0_23] : memref<1x128xf32, #tpu.memory_space<vmem>>, vector<1x128xf32>
      %25 = vector.broadcast %24 : vector<1x128xf32> to vector<16x128xf32>
      %26 = arith.addf %23, %25 : vector<16x128xf32>
      %27 = arith.addf %26, %22 : vector<16x128xf32>
      %c0_24 = arith.constant 0 : index
      %c0_25 = arith.constant 0 : index
      %28 = vector.load %arg8[%c0_24, %c0_25] : memref<16x128xf32, #tpu.memory_space<vmem>>, vector<16x128xf32>
      tpu.vector_store %arg8[%c0_24, %c0_25], %27 {strides = array<i32>} : memref<16x128xf32, #tpu.memory_space<vmem>>, vector<16x128xf32>,
    } else {
    }
    return
  }
  func.func @transform_0(%arg0: i32, %arg1: i32, %arg2: i32) -> (i32, i32) {
    %c0_i32 = arith.constant 0 : i32
    return %arg0, %arg2 : i32, i32
  }
  func.func @transform_1(%arg0: i32, %arg1: i32, %arg2: i32) -> (i32, i32) {
    %c0_i32 = arith.constant 0 : i32
    return %arg1, %arg2 : i32, i32
  }
  func.func @transform_2(%arg0: i32, %arg1: i32, %arg2: i32) -> (i32, i32) {
    %c0_i32 = arith.constant 0 : i32
    %c0_i32_0 = arith.constant 0 : i32
    return %c0_i32, %arg1 : i32, i32
  }
  func.func @transform_3(%arg0: i32, %arg1: i32, %arg2: i32) -> (i32, i32) {
    %c0_i32 = arith.constant 0 : i32
    %c0_i32_0 = arith.constant 0 : i32
    return %c0_i32, %arg2 : i32, i32
  }
  func.func @transform_4(%arg0: i32, %arg1: i32, %arg2: i32) -> (i32, i32) {
    %c0_i32 = arith.constant 0 : i32
    %c0_i32_0 = arith.constant 0 : i32
    return %arg1, %c0_i32 : i32, i32
  }
  func.func @transform_5(%arg0: i32, %arg1: i32, %arg2: i32) -> (i32, i32) {
    %c0_i32 = arith.constant 0 : i32
    return %arg0, %arg1 : i32, i32
  }
}

</mosaic_0001>

<llo_original>
// kernel: tpu_custom_call.1
$region0: #{tpu_custom_call.1}
  #allocation0 [shape = 'u32[]', space=smem, size = 0x4, offset = 0x4, fixed_abs, tag = 'smem constant byte address 0x4 - core index']
  #allocation1 [shape = 'u32[72,128]{1,0:T(1,128)}', space=vmem, size = 0x9000, scoped, tag = 'internal scratch']
  #allocation2 [shape = 'f32[16,128]{1,0:T(8,128)}', space=vmem, size = 0x2000, scoped, tag = 'scratch operand']
  #allocation3 [shape = 'f32[16,8]{1,0:T(8,128)}', space=vmem, size = 0x2000, scoped, tag = 'scratch operand']
  %s0 = inlined_call_operand.hbm [shape: f32[16,128], index: 0, kind: input, shape index: {}]
  %s1 = inlined_call_operand.vmem [shape: f32[128,128], index: 1, kind: input, shape index: {}]
  %s2 = inlined_call_operand.vmem [shape: f32[1,128], index: 2, kind: input, shape index: {}]
  %s3 = inlined_call_operand.vmem [shape: f32[8,128], index: 3, kind: input, shape index: {}]
  %s4 = inlined_call_operand.vmem [shape: f32[128,8], index: 4, kind: input, shape index: {}]
  %s5 = inlined_call_operand.hbm [shape: f32[16,128], index: 5, kind: output, shape index: {}]
  %s6 = sld [smem:[#allocation0]]
  $region50: #{tpu_custom_call.1} parent=0
    _
  %s8 = ssub.s32 1, %s6
  %s9 = scalar_select 0, %s8, %s6
  $region1: #{tpu_custom_call.1} parent=0
    #allocation4 [shape = 'u8[8192]{0}', space=vmem, size = 0x2000, scoped, tag = 'input window, operand 0, single buffered']
    #allocation5 [shape = 's32[1]{0}', space=sflag, size = 0x4, scoped, tag = 'scoped memory for tpu_custom_call.1']
    #allocation6 [shape = 's32[1]{0}', space=sflag, size = 0x4, scoped, tag = 'scoped memory for tpu_custom_call.1']
    #allocation7 [shape = 'u8[8192]{0}', space=vmem, size = 0x2000, scoped, tag = 'output window, operand 0, single buffered']
    %10 = vsyncpa [#allocation5], 0
    %11 = vsyncpa [#allocation6], 0
    // Predicated region
    $region2: #{tpu_custom_call.1} parent=1 // pred_check
      _
    $region3: #{tpu_custom_call.1} parent=1 // pred_check_branch
      %13 = sbr.rel (0) target = $region5
    $region4: #{tpu_custom_call.1} parent=1 // pred_region
      %15 = vsyncadd [#allocation5], 0
      %s16 = sshll.u32 %s0, 4
      %s17 = int_to_ptr.hbm [resolvable:$true] %s16
      %s18 = sshll.u32 [#allocation4], 4
      %s19 = int_to_ptr.vmem [resolvable:$true] %s18
      %24 = dma.hbm_to_vmem [thread:$0]  %s17, 256, %s19, [#allocation5], 128, 128, 8
    $region5: #{tpu_custom_call.1} parent=1 // pred_fallthru
      _
    // Predicated region
    $region6: #{tpu_custom_call.1} parent=1 // pred_check
      _
    $region7: #{tpu_custom_call.1} parent=1 // pred_check_branch
      %26 = sbr.rel (0) target = $region9
    $region8: #{tpu_custom_call.1} parent=1 // pred_region
      _
    $region9: #{tpu_custom_call.1} parent=1 // pred_fallthru
      _
    // Predicated region
    $region10: #{tpu_custom_call.1} parent=1 // pred_check
      _
    $region11: #{tpu_custom_call.1} parent=1 // pred_check_branch
      %28 = sbr.rel (0) target = $region13
    $region12: #{tpu_custom_call.1} parent=1 // pred_region
      _
    $region13: #{tpu_custom_call.1} parent=1 // pred_fallthru
      _
    // Predicated region
    $region14: #{tpu_custom_call.1} parent=1 // pred_check
      _
    $region15: #{tpu_custom_call.1} parent=1 // pred_check_branch
      %30 = sbr.rel (0) target = $region17
    $region16: #{tpu_custom_call.1} parent=1 // pred_region
      _
    $region17: #{tpu_custom_call.1} parent=1 // pred_fallthru
      _
    // Predicated region
    $region18: #{tpu_custom_call.1} parent=1 // pred_check
      _
    $region19: #{tpu_custom_call.1} parent=1 // pred_check_branch
      %32 = sbr.rel (0) target = $region21
    $region20: #{tpu_custom_call.1} parent=1 // pred_region
      _
    $region21: #{tpu_custom_call.1} parent=1 // pred_fallthru
      _
    // Predicated region
    $region22: #{tpu_custom_call.1} parent=1 // pred_check
      _
    $region23: #{tpu_custom_call.1} parent=1 // pred_check_branch
      %34 = sbr.rel (0) target = $region25
    $region24: #{tpu_custom_call.1} parent=1 // pred_region
      %36 = dma.done [#allocation5], 256
    $region25: #{tpu_custom_call.1} parent=1 // pred_fallthru
      _
    %p37 = scmp.eq.s32.totalorder 0, 0
    // Predicated region
    $region26: #{tpu_custom_call.1} parent=1 // pred_check
      %p38 = pneg %p37
    $region27: #{tpu_custom_call.1} parent=1 // pred_check_branch
      %40 = sbr.rel (%p38) target = $region29
    $region28: #{tpu_custom_call.1} parent=1 // pred_region
      %41 = vst [vmem:[#allocation2] sm:$0xff] 0.0
      %42 = vst [vmem:[#allocation2 + $0x8] sm:$0xff] 0.0
    $region29: #{tpu_custom_call.1} parent=1 // pred_fallthru
      _
    %p43 = scmp.eq.s32.totalorder 0, 0
    %p44 = pnand %p43, %p37
    %p45 = pneg %p44
    // Predicated region
    $region30: #{tpu_custom_call.1} parent=1 // pred_check
      _
    $region31: #{tpu_custom_call.1} parent=1 // pred_check_branch
      %47 = sbr.rel (%p44) target = $region33
    $region32: #{tpu_custom_call.1} parent=1 // pred_region
      %vm48 = vcmask 64512
      %49 = vst.msk [vmem:[#allocation3] sm:$0xff] %vm48, 0.0
      %50 = vst.msk [vmem:[#allocation3 + $0x8] sm:$0xff] %vm48, 0.0
    $region33: #{tpu_custom_call.1} parent=1 // pred_fallthru
      _
    %v51 = vld [vmem:[#allocation4] sm:$0xff]
    %v52 = vld [vmem:[#allocation4 + $0x8] sm:$0xff]
    %v53 = vld [vmem:[#allocation2] sm:$0xff]
    %v54 = vld [vmem:[#allocation2 + $0x8] sm:$0xff]
    %v55 = vld [vmem:[%s1] sm:$0xff]
    %v56 = vld [vmem:[%s1 + $0x8] sm:$0xff]
    %v57 = vld [vmem:[%s1 + $0x10] sm:$0xff]
    %v58 = vld [vmem:[%s1 + $0x18] sm:$0xff]
    %v59 = vld [vmem:[%s1 + $0x20] sm:$0xff]
    %v60 = vld [vmem:[%s1 + $0x28] sm:$0xff]
    %v61 = vld [vmem:[%s1 + $0x30] sm:$0xff]
    %v62 = vld [vmem:[%s1 + $0x38] sm:$0xff]
    %v63 = vld [vmem:[%s1 + $0x40] sm:$0xff]
    %v64 = vld [vmem:[%s1 + $0x48] sm:$0xff]
    %v65 = vld [vmem:[%s1 + $0x50] sm:$0xff]
    %v66 = vld [vmem:[%s1 + $0x58] sm:$0xff]
    %v67 = vld [vmem:[%s1 + $0x60] sm:$0xff]
    %v68 = vld [vmem:[%s1 + $0x68] sm:$0xff]
    %v69 = vld [vmem:[%s1 + $0x70] sm:$0xff]
    %v70 = vld [vmem:[%s1 + $0x78] sm:$0xff]
    %71 = vmatpush.xpose.msra.mxu0 %v70
    %72 = vmatpush.xpose.msra.mxu0 %v69
    %73 = vmatpush.xpose.msra.mxu0 %v68
    %74 = vmatpush.xpose.msra.mxu0 %v67
    %75 = vmatpush.xpose.msra.mxu0 %v66
    %76 = vmatpush.xpose.msra.mxu0 %v65
    %77 = vmatpush.xpose.msra.mxu0 %v64
    %78 = vmatpush.xpose.msra.mxu0 %v63
    %79 = vmatpush.xpose.msra.mxu0 %v62
    %80 = vmatpush.xpose.msra.mxu0 %v61
    %81 = vmatpush.xpose.msra.mxu0 %v60
    %82 = vmatpush.xpose.msra.mxu0 %v59
    %83 = vmatpush.xpose.msra.mxu0 %v58
    %84 = vmatpush.xpose.msra.mxu0 %v57
    %85 = vmatpush.xpose.msra.mxu0 %v56
    %86 = vmatpush.xpose.msra.mxu0 %v55
    %87 = vmatmul.f32.gmra.mxu0 %v51
    %v88 = vpop.f32.mrf.mxu0
    %v89 = vadd.f32 0.0, %v88
    %90 = vmatmul.f32.gmra.mxu0 %v52
    %v91 = vpop.f32.mrf.mxu0
    %v92 = vadd.f32 0.0, %v91
    %93 = vdwg.mxu0
    %v94 = vadd.f32 %v53, %v89
    %v95 = vadd.f32 %v54, %v92
    %96 = vst [vmem:[#allocation2] sm:$0xff] %v94
    %97 = vst [vmem:[#allocation2 + $0x8] sm:$0xff] %v95
    // Predicated region
    $region34: #{tpu_custom_call.1} parent=1 // pred_check
      %p98 = pneg %p43
    $region35: #{tpu_custom_call.1} parent=1 // pred_check_branch
      %100 = sbr.rel (%p98) target = $region37
    $region36: #{tpu_custom_call.1} parent=1 // pred_region
      %v101 = vld [vmem:[#allocation3] sm:$0xff]
      %v102 = vld [vmem:[#allocation3 + $0x8] sm:$0xff]
      %v103 = vld [vmem:[%s3] sm:$0xff]
      %104 = vmatpush.xpose.msra.mxu0 0.0
      %105 = vmatpush.xpose.msra.mxu0 0.0
      %106 = vmatpush.xpose.msra.mxu0 0.0
      %107 = vmatpush.xpose.msra.mxu0 0.0
      %108 = vmatpush.xpose.msra.mxu0 0.0
      %109 = vmatpush.xpose.msra.mxu0 0.0
      %110 = vmatpush.xpose.msra.mxu0 0.0
      %111 = vmatpush.xpose.msra.mxu0 0.0
      %112 = vmatpush.xpose.msra.mxu0 0.0
      %113 = vmatpush.xpose.msra.mxu0 0.0
      %114 = vmatpush.xpose.msra.mxu0 0.0
      %115 = vmatpush.xpose.msra.mxu0 0.0
      %116 = vmatpush.xpose.msra.mxu0 0.0
      %117 = vmatpush.xpose.msra.mxu0 0.0
      %118 = vmatpush.xpose.msra.mxu0 0.0
      %119 = vmatpush.xpose.msra.mxu0 %v103
      %120 = vmatmul.f32.gmra.mxu0 %v51
      %v121 = vpop.f32.mrf.mxu0
      %v122 = vadd.f32 0.0, %v121
      %123 = vmatmul.f32.gmra.mxu0 %v52
      %v124 = vpop.f32.mrf.mxu0
      %v125 = vadd.f32 0.0, %v124
      %126 = vdwg.mxu0
      %v127 = vadd.f32 %v101, %v122
      %v128 = vadd.f32 %v102, %v125
      %vm129 = vcmask 64512
      %130 = vst.msk [vmem:[#allocation3] sm:$0xff] %vm129, %v127
      %131 = vst.msk [vmem:[#allocation3 + $0x8] sm:$0xff] %vm129, %v128
    $region37: #{tpu_custom_call.1} parent=1 // pred_fallthru
      _
    // Predicated region
    $region38: #{tpu_custom_call.1} parent=1 // pred_check
      %p132 = pneg %p37
    $region39: #{tpu_custom_call.1} parent=1 // pred_check_branch
      %134 = sbr.rel (%p132) target = $region41
    $region40: #{tpu_custom_call.1} parent=1 // pred_region
      %v135 = vld [vmem:[#allocation3] sm:$0xff]
      %v136 = vld [vmem:[#allocation3 + $0x8] sm:$0xff]
      %v137 = vld [vmem:[%s4] sm:$0xff]
      %v138 = vld [vmem:[%s4 + $0x8] sm:$0xff]
      %v139 = vld [vmem:[%s4 + $0x10] sm:$0xff]
      %v140 = vld [vmem:[%s4 + $0x18] sm:$0xff]
      %v141 = vld [vmem:[%s4 + $0x20] sm:$0xff]
      %v142 = vld [vmem:[%s4 + $0x28] sm:$0xff]
      %v143 = vld [vmem:[%s4 + $0x30] sm:$0xff]
      %v144 = vld [vmem:[%s4 + $0x38] sm:$0xff]
      %v145 = vld [vmem:[%s4 + $0x40] sm:$0xff]
      %v146 = vld [vmem:[%s4 + $0x48] sm:$0xff]
      %v147 = vld [vmem:[%s4 + $0x50] sm:$0xff]
      %v148 = vld [vmem:[%s4 + $0x58] sm:$0xff]
      %v149 = vld [vmem:[%s4 + $0x60] sm:$0xff]
      %v150 = vld [vmem:[%s4 + $0x68] sm:$0xff]
      %v151 = vld [vmem:[%s4 + $0x70] sm:$0xff]
      %v152 = vld [vmem:[%s4 + $0x78] sm:$0xff]
      %vm153 = vcmask 64512
      %v155 = vsel %vm153, %v135, 0
      %v158 = vsel %vm153, %v136, 0
      %v161 = vsel %vm153, %v137, 0
      %v164 = vsel %vm153, %v138, 0
      %v167 = vsel %vm153, %v139, 0
      %v170 = vsel %vm153, %v140, 0
      %v173 = vsel %vm153, %v141, 0
      %v176 = vsel %vm153, %v142, 0
      %v179 = vsel %vm153, %v143, 0
      %v182 = vsel %vm153, %v144, 0
      %v185 = vsel %vm153, %v145, 0
      %v188 = vsel %vm153, %v146, 0
      %v191 = vsel %vm153, %v147, 0
      %v194 = vsel %vm153, %v148, 0
      %v197 = vsel %vm153, %v149, 0
      %v200 = vsel %vm153, %v150, 0
      %v203 = vsel %vm153, %v151, 0
      %v206 = vsel %vm153, %v152, 0
      %208 = vmatpush.xpose.msra.mxu0 %v206
      %209 = vmatpush.xpose.msra.mxu0 %v203
      %210 = vmatpush.xpose.msra.mxu0 %v200
      %211 = vmatpush.xpose.msra.mxu0 %v197
      %212 = vmatpush.xpose.msra.mxu0 %v194
      %213 = vmatpush.xpose.msra.mxu0 %v191
      %214 = vmatpush.xpose.msra.mxu0 %v188
      %215 = vmatpush.xpose.msra.mxu0 %v185
      %216 = vmatpush.xpose.msra.mxu0 %v182
      %217 = vmatpush.xpose.msra.mxu0 %v179
      %218 = vmatpush.xpose.msra.mxu0 %v176
      %219 = vmatpush.xpose.msra.mxu0 %v173
      %220 = vmatpush.xpose.msra.mxu0 %v170
      %221 = vmatpush.xpose.msra.mxu0 %v167
      %222 = vmatpush.xpose.msra.mxu0 %v164
      %223 = vmatpush.xpose.msra.mxu0 %v161
      %224 = vmatmul.f32.gmra.mxu0 %v155
      %v225 = vpop.f32.mrf.mxu0
      %v226 = vadd.f32 0.0, %v225
      %227 = vmatmul.f32.gmra.mxu0 %v158
      %v228 = vpop.f32.mrf.mxu0
      %v229 = vadd.f32 0.0, %v228
      %230 = vdwg.mxu0
      %v231 = vld [vmem:[#allocation2] sm:$0xff]
      %v232 = vld [vmem:[#allocation2 + $0x8] sm:$0xff]
      %v233 = vld [vmem:[%s2] sm:$0x1]
      %v235 = vperm.slane %v233, 0
      %v237 = vadd.f32 %v231, %v235
      %v238 = vadd.f32 %v232, %v235
      %v239 = vadd.f32 %v237, %v226
      %v240 = vadd.f32 %v238, %v229
      %241 = vst [vmem:[#allocation7] sm:$0xff] %v239
      %242 = vst [vmem:[#allocation7 + $0x8] sm:$0xff] %v240
    $region41: #{tpu_custom_call.1} parent=1 // pred_fallthru
      _
    // Predicated region
    $region42: #{tpu_custom_call.1} parent=1 // pred_check
      _
    $region43: #{tpu_custom_call.1} parent=1 // pred_check_branch
      %244 = sbr.rel (0) target = $region45
    $region44: #{tpu_custom_call.1} parent=1 // pred_region
      %246 = vsyncadd [#allocation6], 0
      %s247 = sshll.u32 [#allocation7], 4
      %s248 = int_to_ptr.vmem [resolvable:$true] %s247
      %s249 = sshll.u32 %s5, 4
      %s250 = int_to_ptr.hbm [resolvable:$true] %s249
      %255 = dma.vmem_to_hbm [thread:$0]  %s248, 256, %s250, [#allocation6], 128, 128, 8
    $region45: #{tpu_custom_call.1} parent=1 // pred_fallthru
      _
    // Predicated region
    $region46: #{tpu_custom_call.1} parent=1 // pred_check
      _
    $region47: #{tpu_custom_call.1} parent=1 // pred_check_branch
      %257 = sbr.rel (0) target = $region49
    $region48: #{tpu_custom_call.1} parent=1 // pred_region
      %259 = dma.done [#allocation6], 256
    $region49: #{tpu_custom_call.1} parent=1 // pred_fallthru
      _
    %260 = vsyncpa [#allocation5], 1
    %261 = vsyncpa [#allocation6], 1

</llo_original>
